<compile_context>
chip_gen: v6e
topology: v6e:2x2x1
jax: 0.10.0
libtpu: 0.0.40
codegen_flags: <defaults>
</compile_context>

<pallas_src>
import jax
import jax.numpy as jnp
from jax.experimental import pallas as pl
from jax.experimental.pallas import tpu as pltpu


def _scalar_identity_kernel(const_ref, out_ref):
    # Single scalar SMEM word -> single scalar SMEM word. No vector work.
    out_ref[0] = const_ref[0]


@jax.jit
def scalar_forward(constant_param_1d: jax.Array) -> jax.Array:
    """Pallas equivalent of Scalar.forward(): returns the constant parameter.

    Args:
      constant_param_1d: (1,) float32 array holding the parameter value.
    Returns:
      0-D float32 array (same semantics as the returned nn.Parameter).
    """
    out = pl.pallas_call(
        _scalar_identity_kernel,
        out_shape=jax.ShapeDtypeStruct((1,), jnp.float32),
        in_specs=[pl.BlockSpec(memory_space=pltpu.SMEM)],
        out_specs=pl.BlockSpec(memory_space=pltpu.SMEM),
    )(constant_param_1d)
    # Metadata-only under jit; preserves the 0-D scalar semantics of the
    # PyTorch parameter tensor.
    return out.reshape(())


class ScalarPallas:
    """Mirror of the PyTorch `Scalar` module."""

    def __init__(self, init_value: float):
        # Stored as 1-D f32[1]: TPU-legal, pads to 4 bytes in SMEM (a (1,1)
        # 2-D ref would pad to an [8,128] word window).
        self.constant = jnp.full((1,), init_value, dtype=jnp.float32)

    def forward(self) -> jax.Array:
        # TODO(synk): in the full model, fuse this scalar into its consumer
        # kernel (SMEM / scalar-prefetch operand) instead of a standalone call.
        return scalar_forward(self.constant)

    __call__ = forward


if __name__ == "__main__":
    # forward() takes no tensor inputs; derive the init value deterministically
    # from PRNGKey(0) so the script is reproducible.
    key = jax.random.PRNGKey(0)
    init_value = float(jax.random.normal(key, ()))

    module = ScalarPallas(init_value)
    result = module()
    jax.block_until_ready(result)

    # Sanity check: forward returns exactly the stored constant, as a 0-D f32.
    assert result.shape == ()
    assert result.dtype == jnp.float32
    assert jnp.allclose(result, jnp.float32(init_value))

    # Second call exercises the cached jit executable (no retrace) and confirms
    # the parameter buffer was not consumed (no aliasing / donation).
    result2 = module()
    jax.block_until_ready(result2)
    assert jnp.allclose(result2, result)
    assert jnp.allclose(module.constant[0], jnp.float32(init_value))

    print("KERNEL_OK")
</pallas_src>

<mosaic_0001>
module attributes {stable_mosaic.version = 11 : i64} {
  func.func @_scalar_identity_kernel(%arg0: memref<1xf32, #tpu.memory_space<smem>>, %arg1: memref<1xf32, #tpu.memory_space<smem>>) attributes {dimension_semantics = [], scalar_prefetch = 0 : i64, scratch_operands = 0 : i64, tpu.core_type = #tpu.core_type<tc>} {
    %c0 = arith.constant 0 : index
    %0 = memref.load %arg0[%c0] : memref<1xf32, #tpu.memory_space<smem>>
    %c0_0 = arith.constant 0 : index
    %1 = memref.load %arg1[%c0_0] : memref<1xf32, #tpu.memory_space<smem>>
    memref.store %0, %arg1[%c0_0] : memref<1xf32, #tpu.memory_space<smem>>
    return
  }
}

</mosaic_0001>

<llo_original>
// kernel: scalar_forward.1
$region0: #{scalar_forward.1}
  #allocation0 [shape = 'u32[]', space=smem, size = 0x4, offset = 0x4, fixed_abs, tag = 'smem constant byte address 0x4 - core index']
  #allocation1 [shape = 'u32[144,128]{1,0:T(1,128)}', space=vmem, size = 0x12000, scoped, tag = 'internal scratch']
  #allocation2 [shape = 'f32[1]{0:T(128)S(6)}', space=smem, size = 0x200, scoped, tag = 'scoped memory for scalar_forward.1']
  %s0 = inlined_call_operand.<no memory space> [shape: f32[1], index: 0, kind: input, shape index: {}]
  %s1 = inlined_call_operand.hbm [shape: f32[1], index: 1, kind: output, shape index: {}]
  %s2 = sld [smem:[#allocation0]]
  $region14: #{scalar_forward.1} parent=0
    _
  %s4 = ssub.s32 1, %s2
  %s5 = scalar_select 0, %s4, %s2
  %6 = sst [smem:[#allocation2]] %s0
  $region1: #{scalar_forward.1} parent=0
    #allocation3 [shape = 'u8[512]{0}', space=smem, size = 0x200, scoped, tag = 'output window, operand 0, single buffered']
    #allocation4 [shape = 's32[1]{0}', space=sflag, size = 0x4, scoped, tag = 'scoped memory for scalar_forward.1']
    %7 = vsyncpa [#allocation4], 0
    // Predicated region
    $region2: #{scalar_forward.1} parent=1 // pred_check
      _
    $region3: #{scalar_forward.1} parent=1 // pred_check_branch
      %9 = sbr.rel (0) target = $region5
    $region4: #{scalar_forward.1} parent=1 // pred_region
      _
    $region5: #{scalar_forward.1} parent=1 // pred_fallthru
      _
    %s10 = sld [smem:[#allocation2]]
    %s11 = scalar_lea.smem [#allocation3], 0
    %12 = sst [smem:[%s11]] %s10
    // Predicated region
    $region6: #{scalar_forward.1} parent=1 // pred_check
      _
    $region7: #{scalar_forward.1} parent=1 // pred_check_branch
      %14 = sbr.rel (0) target = $region9
    $region8: #{scalar_forward.1} parent=1 // pred_region
      %s16 = ssub.s32 16, 16
      %17 = vsyncadd [#allocation4], %s16
      %20 = dma.smem_to_hbm [#allocation3], 16, %s1, [#allocation4]
    $region9: #{scalar_forward.1} parent=1 // pred_fallthru
      _
    // Predicated region
    $region10: #{scalar_forward.1} parent=1 // pred_check
      _
    $region11: #{scalar_forward.1} parent=1 // pred_check_branch
      %22 = sbr.rel (0) target = $region13
    $region12: #{scalar_forward.1} parent=1 // pred_region
      %23 = dma.done [#allocation4], 16
    $region13: #{scalar_forward.1} parent=1 // pred_fallthru
      _
    %24 = sfence
    %25 = vsyncpa [#allocation4], 1

</llo_original>
